<compile_context>
chip_gen: v7x
topology: tpu7x:2x2x1
jax: 0.10.0
libtpu: 0.0.40
codegen_flags: <defaults>
</compile_context>

<pallas_src>
import functools

import jax
import jax.numpy as jnp
from jax.experimental import pallas as pl
from jax.experimental.pallas import tpu as pltpu

EPS = 1e-5
MOMENTUM = 0.9
_TARGET_TILE_BYTES = 2 * 1024 * 1024      # per x tile (before double buffering)
_VMEM_LIMIT_BYTES = 32 * 1024 * 1024      # <= default scoped VMEM on every generation


def _pick_c_block(C):
    """Channel rows per block (sublane dim). Full C if not 8-aligned (allowed)."""
    if C % 8 != 0:
        return C
    for cb in (256, 128, 64, 32, 16, 8):
        if C % cb == 0:
            return cb
    return C


def _pick_hw_tile(HW, c_block, itemsize):
    """Lane-dim tile: multiple of 128 that divides HW, sized to ~_TARGET_TILE_BYTES."""
    if HW % 128 != 0:
        return HW                          # full-dim block (allowed by layout rules)
    max_lanes = max(128, (_TARGET_TILE_BYTES // (c_block * itemsize)) // 128 * 128)
    t = min(HW, max_lanes)
    while HW % t != 0:                     # exact divisor -> no ragged tiles
        t -= 128
    return t


def _bn_reduce_kernel(x_ref, rm_ref, rv_ref, a_ref, b_ref,
                      new_mean_ref, new_var_ref, scale_ref, shift_ref,
                      s1_ref, s2_ref, *, inv_l):
    n, t = pl.program_id(1), pl.program_id(2)

    @pl.when((n == 0) & (t == 0))
    def _():
        s1_ref[...] = jnp.zeros_like(s1_ref)
        s2_ref[...] = jnp.zeros_like(s2_ref)

    x = x_ref[...].astype(jnp.float32)                    # (C_BLK, HW_TILE)
    s1_ref[...] += jnp.sum(x, axis=1, keepdims=True)      # f32 accumulation
    s2_ref[...] += jnp.sum(x * x, axis=1, keepdims=True)

    @pl.when((n == pl.num_programs(1) - 1) & (t == pl.num_programs(2) - 1))
    def _():
        mean = s1_ref[...] * inv_l
        var = s2_ref[...] * inv_l - mean * mean            # biased var, as in the module
        new_mean = MOMENTUM * rm_ref[...] + (1.0 - MOMENTUM) * mean
        new_var = MOMENTUM * rv_ref[...] + (1.0 - MOMENTUM) * var
        new_mean_ref[...] = new_mean
        new_var_ref[...] = new_var
        scale = a_ref[...] * jax.lax.rsqrt(new_var + EPS)  # fused per-channel affine
        scale_ref[...] = scale
        shift_ref[...] = b_ref[...] - new_mean * scale


def _bn_normalize_kernel(x_ref, scale_ref, shift_ref, y_ref):
    x = x_ref[...].astype(jnp.float32)
    y_ref[...] = (x * scale_ref[...] + shift_ref[...]).astype(y_ref.dtype)


def batchnorm2d_forward(x_nchw, running_mean, running_var, a, b, *, training=True):
    """Forward pass. Returns (y_nchw, new_running_mean, new_running_var)."""
    N, C, H, W = x_nchw.shape
    HW = H * W
    L = N * HW

    # Free reshape (contiguous) — no host transpose, channels on sublanes.
    x3 = x_nchw.reshape(N, C, HW)
    itemsize = jnp.dtype(x3.dtype).itemsize
    c_blk = _pick_c_block(C)
    hw_tile = _pick_hw_tile(HW, c_blk, itemsize)
    grid = (C // c_blk, N, HW // hw_tile)
    # TODO(synk): block several N images per tile when H*W is small (e.g. 7x7)
    # to keep the lane dimension dense.

    x_spec = pl.BlockSpec((None, c_blk, hw_tile), lambda c, n, t: (n, c, t))
    col_spec = pl.BlockSpec((c_blk, 1), lambda c, n, t: (c, 0))
    col_shape = jax.ShapeDtypeStruct((C, 1), jnp.float32)
    col = lambda v: v.reshape(C, 1).astype(jnp.float32)

    if training:
        new_mean, new_var, scale, shift = pl.pallas_call(
            functools.partial(_bn_reduce_kernel, inv_l=1.0 / float(L)),
            grid=grid,
            in_specs=[x_spec, col_spec, col_spec, col_spec, col_spec],
            out_specs=(col_spec, col_spec, col_spec, col_spec),
            out_shape=(col_shape, col_shape, col_shape, col_shape),
            scratch_shapes=[pltpu.VMEM((c_blk, 1), jnp.float32),
                            pltpu.VMEM((c_blk, 1), jnp.float32)],
            compiler_params=pltpu.CompilerParams(
                dimension_semantics=("parallel", "arbitrary", "arbitrary"),
                vmem_limit_bytes=_VMEM_LIMIT_BYTES),
        )(x3, col(running_mean), col(running_var), col(a), col(b))
    else:
        # Eval mode: no buffer update; tiny (C,1) math stays in plain JAX.
        new_mean = col(running_mean)
        new_var = col(running_var)
        scale = col(a) * jax.lax.rsqrt(new_var + EPS)
        shift = col(b) - new_mean * scale

    y3 = pl.pallas_call(
        _bn_normalize_kernel,
        grid=grid,
        in_specs=[x_spec, col_spec, col_spec],
        out_specs=x_spec,
        out_shape=jax.ShapeDtypeStruct((N, C, HW), x3.dtype),
        compiler_params=pltpu.CompilerParams(
            dimension_semantics=("parallel", "parallel", "parallel"),
            vmem_limit_bytes=_VMEM_LIMIT_BYTES),
    )(x3, scale, shift)

    return y3.reshape(N, C, H, W), new_mean.reshape(C), new_var.reshape(C)


def _reference(x, rm, rv, a, b):
    N, C, H, W = x.shape
    L = N * H * W
    s1 = jnp.sum(x, axis=(0, 2, 3))
    s2 = jnp.sum(x * x, axis=(0, 2, 3))
    mean = s1 / L
    var = s2 / L - mean ** 2
    new_mean = MOMENTUM * rm + (1.0 - MOMENTUM) * mean
    new_var = MOMENTUM * rv + (1.0 - MOMENTUM) * var
    xn = (x - new_mean[None, :, None, None]) / jnp.sqrt(new_var[None, :, None, None] + EPS)
    y = xn * a[None, :, None, None] + b[None, :, None, None]
    return y, new_mean, new_var


if __name__ == "__main__":
    key = jax.random.PRNGKey(0)
    N, C, H, W = 2, 4, 16, 16

    x = jax.random.normal(key, (N, C, H, W), dtype=jnp.float32)

    # Deterministic parameter / buffer init (matches module __init__):
    a = jnp.ones((C,), jnp.float32)            # weight
    b = jnp.zeros((C,), jnp.float32)           # bias
    running_mean = jnp.zeros((C,), jnp.float32)
    running_var = jnp.ones((C,), jnp.float32)

    y, new_mean, new_var = batchnorm2d_forward(x, running_mean, running_var, a, b)
    jax.block_until_ready((y, new_mean, new_var))

    y_ref, m_ref, v_ref = _reference(x, running_mean, running_var, a, b)
    assert jnp.allclose(y, y_ref, atol=1e-4, rtol=1e-4)
    assert jnp.allclose(new_mean, m_ref, atol=1e-5)
    assert jnp.allclose(new_var, v_ref, atol=1e-5)

    print("KERNEL_OK")
</pallas_src>

<mosaic_0001>
module attributes {stable_mosaic.version = 11 : i64} {
  func.func @_bn_reduce_kernel(%arg0: i32, %arg1: i32, %arg2: i32, %arg3: memref<1x4x256xf32, #tpu.memory_space<vmem>>, %arg4: memref<4x1xf32, #tpu.memory_space<vmem>>, %arg5: memref<4x1xf32, #tpu.memory_space<vmem>>, %arg6: memref<4x1xf32, #tpu.memory_space<vmem>>, %arg7: memref<4x1xf32, #tpu.memory_space<vmem>>, %arg8: memref<4x1xf32, #tpu.memory_space<vmem>>, %arg9: memref<4x1xf32, #tpu.memory_space<vmem>>, %arg10: memref<4x1xf32, #tpu.memory_space<vmem>>, %arg11: memref<4x1xf32, #tpu.memory_space<vmem>>, %arg12: memref<4x1xf32, #tpu.memory_space<vmem>>, %arg13: memref<4x1xf32, #tpu.memory_space<vmem>>) attributes {dimension_semantics = [#tpu.dimension_semantics<parallel>, #tpu.dimension_semantics<arbitrary>, #tpu.dimension_semantics<arbitrary>], iteration_bounds = array<i64: 1, 2, 1>, scalar_prefetch = 0 : i64, scratch_operands = 2 : i64, tpu.core_type = #tpu.core_type<tc>, window_params = [{transform_indices = @transform_0, window_bounds = array<i64: 1, 4, 256>}, {transform_indices = @transform_1, window_bounds = array<i64: 4, 1>}, {transform_indices = @transform_2, window_bounds = array<i64: 4, 1>}, {transform_indices = @transform_3, window_bounds = array<i64: 4, 1>}, {transform_indices = @transform_4, window_bounds = array<i64: 4, 1>}, {transform_indices = @transform_5, window_bounds = array<i64: 4, 1>}, {transform_indices = @transform_6, window_bounds = array<i64: 4, 1>}, {transform_indices = @transform_7, window_bounds = array<i64: 4, 1>}, {transform_indices = @transform_8, window_bounds = array<i64: 4, 1>}]} {
    %c0_i32 = arith.constant 0 : i32
    %0 = arith.cmpi eq, %arg1, %c0_i32 : i32
    %c0_i32_0 = arith.constant 0 : i32
    %1 = arith.cmpi eq, %arg2, %c0_i32_0 : i32
    %2 = arith.andi %0, %1 : i1
    %3 = arith.extui %2 : i1 to i32
    %c0_i32_1 = arith.constant 0 : i32
    %4 = arith.cmpi ne, %3, %c0_i32_1 : i32
    scf.if %4 {
      %cst_15 = arith.constant 0.000000e+00 : f32
      %23 = vector.broadcast %cst_15 : f32 to vector<4x1xf32>
      %c0_16 = arith.constant 0 : index
      %c0_17 = arith.constant 0 : index
      %24 = vector.load %arg12[%c0_16, %c0_17] : memref<4x1xf32, #tpu.memory_space<vmem>>, vector<4x1xf32>
      tpu.vector_store %arg12[%c0_16, %c0_17], %23 {strides = array<i32>} : memref<4x1xf32, #tpu.memory_space<vmem>>, vector<4x1xf32>,
      %cst_18 = arith.constant 0.000000e+00 : f32
      %25 = vector.broadcast %cst_18 : f32 to vector<4x1xf32>
      %c0_19 = arith.constant 0 : index
      %c0_20 = arith.constant 0 : index
      %26 = vector.load %arg13[%c0_19, %c0_20] : memref<4x1xf32, #tpu.memory_space<vmem>>, vector<4x1xf32>
      tpu.vector_store %arg13[%c0_19, %c0_20], %25 {strides = array<i32>} : memref<4x1xf32, #tpu.memory_space<vmem>>, vector<4x1xf32>,
    } else {
    }
    %c0 = arith.constant 0 : index
    %c0_2 = arith.constant 0 : index
    %c0_3 = arith.constant 0 : index
    %5 = vector.load %arg3[%c0, %c0_2, %c0_3] : memref<1x4x256xf32, #tpu.memory_space<vmem>>, vector<1x4x256xf32>
    %6 = vector.shape_cast %5 : vector<1x4x256xf32> to vector<4x256xf32>
    %c0_4 = arith.constant 0 : index
    %c0_5 = arith.constant 0 : index
    %7 = vector.load %arg12[%c0_4, %c0_5] : memref<4x1xf32, #tpu.memory_space<vmem>>, vector<4x1xf32>
    %cst = arith.constant dense<0.000000e+00> : vector<4xf32>
    %8 = vector.multi_reduction <add>, %6, %cst [1] : vector<4x256xf32> to vector<4xf32>
    %9 = vector.shape_cast %8 : vector<4xf32> to vector<4x1xf32>
    %10 = arith.addf %7, %9 : vector<4x1xf32>
    %c0_6 = arith.constant 0 : index
    %c0_7 = arith.constant 0 : index
    %11 = vector.load %arg12[%c0_6, %c0_7] : memref<4x1xf32, #tpu.memory_space<vmem>>, vector<4x1xf32>
    tpu.vector_store %arg12[%c0_6, %c0_7], %10 {strides = array<i32>} : memref<4x1xf32, #tpu.memory_space<vmem>>, vector<4x1xf32>,
    %c0_8 = arith.constant 0 : index
    %c0_9 = arith.constant 0 : index
    %12 = vector.load %arg13[%c0_8, %c0_9] : memref<4x1xf32, #tpu.memory_space<vmem>>, vector<4x1xf32>
    %13 = arith.mulf %6, %6 : vector<4x256xf32>
    %cst_10 = arith.constant dense<0.000000e+00> : vector<4xf32>
    %14 = vector.multi_reduction <add>, %13, %cst_10 [1] : vector<4x256xf32> to vector<4xf32>
    %15 = vector.shape_cast %14 : vector<4xf32> to vector<4x1xf32>
    %16 = arith.addf %12, %15 : vector<4x1xf32>
    %c0_11 = arith.constant 0 : index
    %c0_12 = arith.constant 0 : index
    %17 = vector.load %arg13[%c0_11, %c0_12] : memref<4x1xf32, #tpu.memory_space<vmem>>, vector<4x1xf32>
    tpu.vector_store %arg13[%c0_11, %c0_12], %16 {strides = array<i32>} : memref<4x1xf32, #tpu.memory_space<vmem>>, vector<4x1xf32>,
    %c1_i32 = arith.constant 1 : i32
    %18 = arith.cmpi eq, %arg1, %c1_i32 : i32
    %c0_i32_13 = arith.constant 0 : i32
    %19 = arith.cmpi eq, %arg2, %c0_i32_13 : i32
    %20 = arith.andi %18, %19 : i1
    %21 = arith.extui %20 : i1 to i32
    %c0_i32_14 = arith.constant 0 : i32
    %22 = arith.cmpi ne, %21, %c0_i32_14 : i32
    scf.if %22 {
      %c0_15 = arith.constant 0 : index
      %c0_16 = arith.constant 0 : index
      %23 = vector.load %arg12[%c0_15, %c0_16] : memref<4x1xf32, #tpu.memory_space<vmem>>, vector<4x1xf32>
      %cst_17 = arith.constant 0.001953125 : f32
      %24 = vector.broadcast %cst_17 : f32 to vector<4x1xf32>
      %25 = arith.mulf %23, %24 : vector<4x1xf32>
      %c0_18 = arith.constant 0 : index
      %c0_19 = arith.constant 0 : index
      %26 = vector.load %arg13[%c0_18, %c0_19] : memref<4x1xf32, #tpu.memory_space<vmem>>, vector<4x1xf32>
      %cst_20 = arith.constant 0.001953125 : f32
      %27 = vector.broadcast %cst_20 : f32 to vector<4x1xf32>
      %28 = arith.mulf %26, %27 : vector<4x1xf32>
      %29 = arith.mulf %25, %25 : vector<4x1xf32>
      %30 = arith.subf %28, %29 : vector<4x1xf32>
      %c0_21 = arith.constant 0 : index
      %c0_22 = arith.constant 0 : index
      %31 = vector.load %arg4[%c0_21, %c0_22] : memref<4x1xf32, #tpu.memory_space<vmem>>, vector<4x1xf32>
      %cst_23 = arith.constant 0.899999976 : f32
      %32 = vector.broadcast %cst_23 : f32 to vector<4x1xf32>
      %33 = arith.mulf %32, %31 : vector<4x1xf32>
      %cst_24 = arith.constant 1.000000e-01 : f32
      %34 = vector.broadcast %cst_24 : f32 to vector<4x1xf32>
      %35 = arith.mulf %34, %25 : vector<4x1xf32>
      %36 = arith.addf %33, %35 : vector<4x1xf32>
      %c0_25 = arith.constant 0 : index
      %c0_26 = arith.constant 0 : index
      %37 = vector.load %arg5[%c0_25, %c0_26] : memref<4x1xf32, #tpu.memory_space<vmem>>, vector<4x1xf32>
      %cst_27 = arith.constant 0.899999976 : f32
      %38 = vector.broadcast %cst_27 : f32 to vector<4x1xf32>
      %39 = arith.mulf %38, %37 : vector<4x1xf32>
      %cst_28 = arith.constant 1.000000e-01 : f32
      %40 = vector.broadcast %cst_28 : f32 to vector<4x1xf32>
      %41 = arith.mulf %40, %30 : vector<4x1xf32>
      %42 = arith.addf %39, %41 : vector<4x1xf32>
      %c0_29 = arith.constant 0 : index
      %c0_30 = arith.constant 0 : index
      %43 = vector.load %arg8[%c0_29, %c0_30] : memref<4x1xf32, #tpu.memory_space<vmem>>, vector<4x1xf32>
      tpu.vector_store %arg8[%c0_29, %c0_30], %36 {strides = array<i32>} : memref<4x1xf32, #tpu.memory_space<vmem>>, vector<4x1xf32>,
      %c0_31 = arith.constant 0 : index
      %c0_32 = arith.constant 0 : index
      %44 = vector.load %arg9[%c0_31, %c0_32] : memref<4x1xf32, #tpu.memory_space<vmem>>, vector<4x1xf32>
      tpu.vector_store %arg9[%c0_31, %c0_32], %42 {strides = array<i32>} : memref<4x1xf32, #tpu.memory_space<vmem>>, vector<4x1xf32>,
      %c0_33 = arith.constant 0 : index
      %c0_34 = arith.constant 0 : index
      %45 = vector.load %arg6[%c0_33, %c0_34] : memref<4x1xf32, #tpu.memory_space<vmem>>, vector<4x1xf32>
      %cst_35 = arith.constant 9.99999974E-6 : f32
      %46 = vector.broadcast %cst_35 : f32 to vector<4x1xf32>
      %47 = arith.addf %42, %46 : vector<4x1xf32>
      %48 = math.rsqrt %47 : vector<4x1xf32>
      %49 = arith.mulf %45, %48 : vector<4x1xf32>
      %c0_36 = arith.constant 0 : index
      %c0_37 = arith.constant 0 : index
      %50 = vector.load %arg10[%c0_36, %c0_37] : memref<4x1xf32, #tpu.memory_space<vmem>>, vector<4x1xf32>
      tpu.vector_store %arg10[%c0_36, %c0_37], %49 {strides = array<i32>} : memref<4x1xf32, #tpu.memory_space<vmem>>, vector<4x1xf32>,
      %c0_38 = arith.constant 0 : index
      %c0_39 = arith.constant 0 : index
      %51 = vector.load %arg7[%c0_38, %c0_39] : memref<4x1xf32, #tpu.memory_space<vmem>>, vector<4x1xf32>
      %52 = arith.mulf %36, %49 : vector<4x1xf32>
      %53 = arith.subf %51, %52 : vector<4x1xf32>
      %c0_40 = arith.constant 0 : index
      %c0_41 = arith.constant 0 : index
      %54 = vector.load %arg11[%c0_40, %c0_41] : memref<4x1xf32, #tpu.memory_space<vmem>>, vector<4x1xf32>
      tpu.vector_store %arg11[%c0_40, %c0_41], %53 {strides = array<i32>} : memref<4x1xf32, #tpu.memory_space<vmem>>, vector<4x1xf32>,
    } else {
    }
    return
  }
  func.func @transform_0(%arg0: i32, %arg1: i32, %arg2: i32) -> (i32, i32, i32) {
    %c0_i32 = arith.constant 0 : i32
    return %arg1, %arg0, %arg2 : i32, i32, i32
  }
  func.func @transform_1(%arg0: i32, %arg1: i32, %arg2: i32) -> (i32, i32) {
    %c0_i32 = arith.constant 0 : i32
    %c0_i32_0 = arith.constant 0 : i32
    return %arg0, %c0_i32 : i32, i32
  }
  func.func @transform_2(%arg0: i32, %arg1: i32, %arg2: i32) -> (i32, i32) {
    %c0_i32 = arith.constant 0 : i32
    %c0_i32_0 = arith.constant 0 : i32
    return %arg0, %c0_i32 : i32, i32
  }
  func.func @transform_3(%arg0: i32, %arg1: i32, %arg2: i32) -> (i32, i32) {
    %c0_i32 = arith.constant 0 : i32
    %c0_i32_0 = arith.constant 0 : i32
    return %arg0, %c0_i32 : i32, i32
  }
  func.func @transform_4(%arg0: i32, %arg1: i32, %arg2: i32) -> (i32, i32) {
    %c0_i32 = arith.constant 0 : i32
    %c0_i32_0 = arith.constant 0 : i32
    return %arg0, %c0_i32 : i32, i32
  }
  func.func @transform_5(%arg0: i32, %arg1: i32, %arg2: i32) -> (i32, i32) {
    %c0_i32 = arith.constant 0 : i32
    %c0_i32_0 = arith.constant 0 : i32
    return %arg0, %c0_i32 : i32, i32
  }
  func.func @transform_6(%arg0: i32, %arg1: i32, %arg2: i32) -> (i32, i32) {
    %c0_i32 = arith.constant 0 : i32
    %c0_i32_0 = arith.constant 0 : i32
    return %arg0, %c0_i32 : i32, i32
  }
  func.func @transform_7(%arg0: i32, %arg1: i32, %arg2: i32) -> (i32, i32) {
    %c0_i32 = arith.constant 0 : i32
    %c0_i32_0 = arith.constant 0 : i32
    return %arg0, %c0_i32 : i32, i32
  }
  func.func @transform_8(%arg0: i32, %arg1: i32, %arg2: i32) -> (i32, i32) {
    %c0_i32 = arith.constant 0 : i32
    %c0_i32_0 = arith.constant 0 : i32
    return %arg0, %c0_i32 : i32, i32
  }
}

</mosaic_0001>

<llo_original>
// kernel: tpu_custom_call.1
$region0: #{tpu_custom_call.1}
  #allocation0 [shape = 'u32[]', space=smem, size = 0x4, offset = 0x4, fixed_abs, tag = 'smem constant byte address 0x4 - core index']
  #allocation1 [shape = 'u32[144,128]{1,0:T(1,128)}', space=vmem, size = 0x12000, scoped, tag = 'internal scratch']
  #allocation2 [shape = 'f32[4,1]{1,0:T(4,128)}', space=vmem, size = 0x800, scoped, tag = 'scratch operand']
  #allocation3 [shape = 'f32[4,1]{1,0:T(4,128)}', space=vmem, size = 0x800, scoped, tag = 'scratch operand']
  %s0 = inlined_call_operand.vmem [shape: f32[2,4,256], index: 0, kind: input, shape index: {}]
  %s1 = inlined_call_operand.vmem [shape: f32[4,1], index: 1, kind: input, shape index: {}]
  %s2 = inlined_call_operand.vmem [shape: f32[4,1], index: 2, kind: input, shape index: {}]
  %s3 = inlined_call_operand.vmem [shape: f32[4,1], index: 3, kind: input, shape index: {}]
  %s4 = inlined_call_operand.vmem [shape: f32[4,1], index: 4, kind: input, shape index: {}]
  %s5 = inlined_call_operand.vmem [shape: f32[4,1], index: 5, kind: output, shape index: {0}]
  %s6 = inlined_call_operand.vmem [shape: f32[4,1], index: 6, kind: output, shape index: {1}]
  %s7 = inlined_call_operand.vmem [shape: f32[4,1], index: 7, kind: output, shape index: {2}]
  %s8 = inlined_call_operand.vmem [shape: f32[4,1], index: 8, kind: output, shape index: {3}]
  %9 = xla_tuple %s5, %s6, %s7, %s8
  %s10 = sld [smem:[#allocation0]]
  $region85: #{tpu_custom_call.1} parent=0
    _
  %s12 = ssub.s32 1, %s10
  %s13 = scalar_select 0, %s12, %s10
  loop: start=0, step=1, limit=4
  $region2: #{tpu_custom_call.1} parent=0 // loop_pre_header
    _
  $region3: #{tpu_custom_call.1} parent=0 // loop_header
    %s15 = sphi 0, %s19
    %p16 = scmp.ge.s32.totalorder %s15, 4
    %s22 = sphi 0, %s41
    %s23 = sphi 0, %s37
    %s24 = sphi 0, %s33
    %s25 = sphi 0, %s22
    %s26 = sphi 0, %s23
    %s27 = sphi 0, %s24
    %s28 = sphi 0, %s25
    %s29 = sphi 0, %s26
    %s30 = sphi 0, %s27
    %s48 = sphi 0, %s50
    %s51 = sphi 0, %s48
    %s52 = sphi 0, %s51
    %s68 = sphi 0, %s52
    %s74 = sphi 0, %s76
    %s77 = sphi 0, %s74
    %s78 = sphi 0, %s77
    %s94 = sphi 0, %s78
    %s100 = sphi 0, %s102
    %s103 = sphi 0, %s100
    %s104 = sphi 0, %s103
    %s120 = sphi 0, %s104
    %s126 = sphi 0, %s128
    %s129 = sphi 0, %s126
    %s130 = sphi 0, %s129
    %s146 = sphi 0, %s130
    %s152 = sphi 0, %s154
    %s155 = sphi 0, %s152
    %s156 = sphi 0, %s155
    %s172 = sphi 0, %s156
    %s178 = sphi 0, %s180
    %s181 = sphi 0, %s178
    %s182 = sphi 0, %s181
    %s198 = sphi 0, %s182
    %s204 = sphi 0, %s206
    %s207 = sphi 0, %s204
    %s208 = sphi 0, %s207
    %s224 = sphi 0, %s208
    %s230 = sphi 0, %s232
    %s233 = sphi 0, %s230
    %s234 = sphi 0, %s233
    %s250 = sphi 0, %s234
    %s256 = sphi 0, %s258
    %s259 = sphi 0, %s256
    %s260 = sphi 0, %s259
    %s276 = sphi 0, %s260
  $region4: #{tpu_custom_call.1} parent=0 // loop_header_branch
    %18 = sbr.rel (%p16) target = $region8
  $region5: #{tpu_custom_call.1} parent=0 // loop_body
    %s20 = ssub.s32 %s15, 1
    %s21 = ssub.s32 %s15, 2
    %s31 = sadd.s32 1, %s24
    %p32 = scmp.ge.s32.totalorder %s31, 1
    %s33 = scalar_select %p32, 0, %s31
    %s34 = sadd.s32 1, %s23
    %s35 = scalar_select %p32, %s34, %s23
    %p36 = scmp.ge.s32.totalorder %s35, 2
    %s37 = scalar_select %p36, 0, %s35
    %s38 = sadd.s32 1, %s22
    %s39 = scalar_select %p36, %s38, %s22
    %p40 = scmp.ge.s32.totalorder %s39, 1
    %s41 = scalar_select %p40, 0, %s39
    %s42 = ssub.s32 %s23, %s37
    %s43 = ssub.s32 %s22, %s41
    %s44 = sor.u32 %s42, %s43
    %s45 = ssub.s32 %s24, %s33
    %s46 = sor.u32 %s44, %s45
    %p47 = scmp.eq.s32.totalorder %s46, 0
    %s49 = sadd.s32 %s48, 1
    %s50 = scalar_select %p47, %s48, %s49
    %p53 = pneg %p47
    %p54 = scmp.eq.s32.totalorder %s15, 1
    %p55 = por %p53, %p54
    %p56 = scmp.ne.s32.totalorder %s48, %s51
    %p57 = scmp.eq.s32.totalorder %s15, 0
    %p58 = por %p56, %p57
    %p59 = scmp.ne.s32.totalorder %s48, %s51
    %p60 = scmp.eq.s32.totalorder %s20, 1
    %p61 = por %p59, %p60
    %p62 = scmp.ne.s32.totalorder %s51, %s52
    %p63 = scmp.eq.s32.totalorder %s20, 0
    %p64 = por %p62, %p63
    %p65 = scmp.ne.s32.totalorder %s51, %s52
    %p66 = scmp.eq.s32.totalorder %s21, 1
    %p67 = por %p65, %p66
    %p69 = scmp.ne.s32.totalorder %s52, %s68
    %p70 = scmp.eq.s32.totalorder %s21, 0
    %p71 = por %p69, %p70
    %s72 = ssub.s32 %s22, %s41
    %p73 = scmp.eq.s32.totalorder %s72, 0
    %s75 = sadd.s32 %s74, 1
    %s76 = scalar_select %p73, %s74, %s75
    %p79 = pneg %p73
    %p80 = scmp.eq.s32.totalorder %s15, 1
    %p81 = por %p79, %p80
    %p82 = scmp.ne.s32.totalorder %s74, %s77
    %p83 = scmp.eq.s32.totalorder %s15, 0
    %p84 = por %p82, %p83
    %p85 = scmp.ne.s32.totalorder %s74, %s77
    %p86 = scmp.eq.s32.totalorder %s20, 1
    %p87 = por %p85, %p86
    %p88 = scmp.ne.s32.totalorder %s77, %s78
    %p89 = scmp.eq.s32.totalorder %s20, 0
    %p90 = por %p88, %p89
    %p91 = scmp.ne.s32.totalorder %s77, %s78
    %p92 = scmp.eq.s32.totalorder %s21, 1
    %p93 = por %p91, %p92
    %p95 = scmp.ne.s32.totalorder %s78, %s94
    %p96 = scmp.eq.s32.totalorder %s21, 0
    %p97 = por %p95, %p96
    %s98 = ssub.s32 %s22, %s41
    %p99 = scmp.eq.s32.totalorder %s98, 0
    %s101 = sadd.s32 %s100, 1
    %s102 = scalar_select %p99, %s100, %s101
    %p105 = pneg %p99
    %p106 = scmp.eq.s32.totalorder %s15, 1
    %p107 = por %p105, %p106
    %p108 = scmp.ne.s32.totalorder %s100, %s103
    %p109 = scmp.eq.s32.totalorder %s15, 0
    %p110 = por %p108, %p109
    %p111 = scmp.ne.s32.totalorder %s100, %s103
    %p112 = scmp.eq.s32.totalorder %s20, 1
    %p113 = por %p111, %p112
    %p114 = scmp.ne.s32.totalorder %s103, %s104
    %p115 = scmp.eq.s32.totalorder %s20, 0
    %p116 = por %p114, %p115
    %p117 = scmp.ne.s32.totalorder %s103, %s104
    %p118 = scmp.eq.s32.totalorder %s21, 1
    %p119 = por %p117, %p118
    %p121 = scmp.ne.s32.totalorder %s104, %s120
    %p122 = scmp.eq.s32.totalorder %s21, 0
    %p123 = por %p121, %p122
    %s124 = ssub.s32 %s22, %s41
    %p125 = scmp.eq.s32.totalorder %s124, 0
    %s127 = sadd.s32 %s126, 1
    %s128 = scalar_select %p125, %s126, %s127
    %p131 = pneg %p125
    %p132 = scmp.eq.s32.totalorder %s15, 1
    %p133 = por %p131, %p132
    %p134 = scmp.ne.s32.totalorder %s126, %s129
    %p135 = scmp.eq.s32.totalorder %s15, 0
    %p136 = por %p134, %p135
    %p137 = scmp.ne.s32.totalorder %s126, %s129
    %p138 = scmp.eq.s32.totalorder %s20, 1
    %p139 = por %p137, %p138
    %p140 = scmp.ne.s32.totalorder %s129, %s130
    %p141 = scmp.eq.s32.totalorder %s20, 0
    %p142 = por %p140, %p141
    %p143 = scmp.ne.s32.totalorder %s129, %s130
    %p144 = scmp.eq.s32.totalorder %s21, 1
    %p145 = por %p143, %p144
    %p147 = scmp.ne.s32.totalorder %s130, %s146
    %p148 = scmp.eq.s32.totalorder %s21, 0
    %p149 = por %p147, %p148
    %s150 = ssub.s32 %s22, %s41
    %p151 = scmp.eq.s32.totalorder %s150, 0
    %s153 = sadd.s32 %s152, 1
    %s154 = scalar_select %p151, %s152, %s153
    %p157 = pneg %p151
    %p158 = scmp.eq.s32.totalorder %s15, 1
    %p159 = por %p157, %p158
    %p160 = scmp.ne.s32.totalorder %s152, %s155
    %p161 = scmp.eq.s32.totalorder %s15, 0
    %p162 = por %p160, %p161
    %p163 = scmp.ne.s32.totalorder %s152, %s155
    %p164 = scmp.eq.s32.totalorder %s20, 1
    %p165 = por %p163, %p164
    %p166 = scmp.ne.s32.totalorder %s155, %s156
    %p167 = scmp.eq.s32.totalorder %s20, 0
    %p168 = por %p166, %p167
    %p169 = scmp.ne.s32.totalorder %s155, %s156
    %p170 = scmp.eq.s32.totalorder %s21, 1
    %p171 = por %p169, %p170
    %p173 = scmp.ne.s32.totalorder %s156, %s172
    %p174 = scmp.eq.s32.totalorder %s21, 0
    %p175 = por %p173, %p174
    %s176 = ssub.s32 %s22, %s41
    %p177 = scmp.eq.s32.totalorder %s176, 0
    %s179 = sadd.s32 %s178, 1
    %s180 = scalar_select %p177, %s178, %s179
    %p183 = pneg %p177
    %p184 = scmp.eq.s32.totalorder %s15, 1
    %p185 = por %p183, %p184
    %p186 = scmp.ne.s32.totalorder %s178, %s181
    %p187 = scmp.eq.s32.totalorder %s15, 0
    %p188 = por %p186, %p187
    %p189 = scmp.ne.s32.totalorder %s178, %s181
    %p190 = scmp.eq.s32.totalorder %s20, 1
    %p191 = por %p189, %p190
    %p192 = scmp.ne.s32.totalorder %s181, %s182
    %p193 = scmp.eq.s32.totalorder %s20, 0
    %p194 = por %p192, %p193
    %p195 = scmp.ne.s32.totalorder %s181, %s182
    %p196 = scmp.eq.s32.totalorder %s21, 1
    %p197 = por %p195, %p196
    %p199 = scmp.ne.s32.totalorder %s182, %s198
    %p200 = scmp.eq.s32.totalorder %s21, 0
    %p201 = por %p199, %p200
    %s202 = ssub.s32 %s22, %s41
    %p203 = scmp.eq.s32.totalorder %s202, 0
    %s205 = sadd.s32 %s204, 1
    %s206 = scalar_select %p203, %s204, %s205
    %p209 = pneg %p203
    %p210 = scmp.eq.s32.totalorder %s15, 1
    %p211 = por %p209, %p210
    %p212 = scmp.ne.s32.totalorder %s204, %s207
    %p213 = scmp.eq.s32.totalorder %s15, 0
    %p214 = por %p212, %p213
    %p215 = scmp.ne.s32.totalorder %s204, %s207
    %p216 = scmp.eq.s32.totalorder %s20, 1
    %p217 = por %p215, %p216
    %p218 = scmp.ne.s32.totalorder %s207, %s208
    %p219 = scmp.eq.s32.totalorder %s20, 0
    %p220 = por %p218, %p219
    %p221 = scmp.ne.s32.totalorder %s207, %s208
    %p222 = scmp.eq.s32.totalorder %s21, 1
    %p223 = por %p221, %p222
    %p225 = scmp.ne.s32.totalorder %s208, %s224
    %p226 = scmp.eq.s32.totalorder %s21, 0
    %p227 = por %p225, %p226
    %s228 = ssub.s32 %s22, %s41
    %p229 = scmp.eq.s32.totalorder %s228, 0
    %s231 = sadd.s32 %s230, 1
    %s232 = scalar_select %p229, %s230, %s231
    %p235 = pneg %p229
    %p236 = scmp.eq.s32.totalorder %s15, 1
    %p237 = por %p235, %p236
    %p238 = scmp.ne.s32.totalorder %s230, %s233
    %p239 = scmp.eq.s32.totalorder %s15, 0
    %p240 = por %p238, %p239
    %p241 = scmp.ne.s32.totalorder %s230, %s233
    %p242 = scmp.eq.s32.totalorder %s20, 1
    %p243 = por %p241, %p242
    %p244 = scmp.ne.s32.totalorder %s233, %s234
    %p245 = scmp.eq.s32.totalorder %s20, 0
    %p246 = por %p244, %p245
    %p247 = scmp.ne.s32.totalorder %s233, %s234
    %p248 = scmp.eq.s32.totalorder %s21, 1
    %p249 = por %p247, %p248
    %p251 = scmp.ne.s32.totalorder %s234, %s250
    %p252 = scmp.eq.s32.totalorder %s21, 0
    %p253 = por %p251, %p252
    %s254 = ssub.s32 %s22, %s41
    %p255 = scmp.eq.s32.totalorder %s254, 0
    %s257 = sadd.s32 %s256, 1
    %s258 = scalar_select %p255, %s256, %s257
    %p261 = pneg %p255
    %p262 = scmp.eq.s32.totalorder %s15, 1
    %p263 = por %p261, %p262
    %p264 = scmp.ne.s32.totalorder %s256, %s259
    %p265 = scmp.eq.s32.totalorder %s15, 0
    %p266 = por %p264, %p265
    %p267 = scmp.ne.s32.totalorder %s256, %s259
    %p268 = scmp.eq.s32.totalorder %s20, 1
    %p269 = por %p267, %p268
    %p270 = scmp.ne.s32.totalorder %s259, %s260
    %p271 = scmp.eq.s32.totalorder %s20, 0
    %p272 = por %p270, %p271
    %p273 = scmp.ne.s32.totalorder %s259, %s260
    %p274 = scmp.eq.s32.totalorder %s21, 1
    %p275 = por %p273, %p274
    %p277 = scmp.ne.s32.totalorder %s260, %s276
    %p278 = scmp.eq.s32.totalorder %s21, 0
    %p279 = por %p277, %p278
    %p280 = scmp.le.s32.totalorder 1, %s15
    %p281 = scmp.lt.s32.totalorder %s15, 3
    %p282 = pnand %p280, %p281
    %p283 = pneg %p282
    // Predicated region
    $region9: #{tpu_custom_call.1} parent=5 // pred_check
      _
    $region10: #{tpu_custom_call.1} parent=5 // pred_check_branch
      %285 = sbr.rel (%p282) target = $region12
    $region11: #{tpu_custom_call.1} parent=5 // pred_region
      %s286 = ssub.s32 %s15, 1
      // Predicated region
      $region13: #{tpu_custom_call.1} parent=11 // pred_check
        %p287 = pneg %p90
      $region14: #{tpu_custom_call.1} parent=11 // pred_check_branch
        %289 = sbr.rel (%p287) target = $region16
      $region15: #{tpu_custom_call.1} parent=11 // pred_region
        %p290 = scmp.lt.s32.totalorder %s25, 0
        %s291 = scalar_select %p290, %s25, 0
        %s292 = smul.addr %s291, 4
        %s293 = scalar_lea.vmem %s1, %s292
      $region16: #{tpu_custom_call.1} parent=11 // pred_fallthru
        _
      // Predicated region
      $region17: #{tpu_custom_call.1} parent=11 // pred_check
        %p294 = pneg %p116
      $region18: #{tpu_custom_call.1} parent=11 // pred_check_branch
        %296 = sbr.rel (%p294) target = $region20
      $region19: #{tpu_custom_call.1} parent=11 // pred_region
        %p297 = scmp.lt.s32.totalorder %s25, 0
        %s298 = scalar_select %p297, %s25, 0
        %s299 = smul.addr %s298, 4
        %s300 = scalar_lea.vmem %s2, %s299
      $region20: #{tpu_custom_call.1} parent=11 // pred_fallthru
        _
      // Predicated region
      $region21: #{tpu_custom_call.1} parent=11 // pred_check
        %p301 = pneg %p142
      $region22: #{tpu_custom_call.1} parent=11 // pred_check_branch
        %303 = sbr.rel (%p301) target = $region24
      $region23: #{tpu_custom_call.1} parent=11 // pred_region
        %p304 = scmp.lt.s32.totalorder %s25, 0
        %s305 = scalar_select %p304, %s25, 0
        %s306 = smul.addr %s305, 4
        %s307 = scalar_lea.vmem %s3, %s306
      $region24: #{tpu_custom_call.1} parent=11 // pred_fallthru
        _
      // Predicated region
      $region25: #{tpu_custom_call.1} parent=11 // pred_check
        %p308 = pneg %p168
      $region26: #{tpu_custom_call.1} parent=11 // pred_check_branch
        %310 = sbr.rel (%p308) target = $region28
      $region27: #{tpu_custom_call.1} parent=11 // pred_region
        %p311 = scmp.lt.s32.totalorder %s25, 0
        %s312 = scalar_select %p311, %s25, 0
        %s313 = smul.addr %s312, 4
        %s314 = scalar_lea.vmem %s4, %s313
      $region28: #{tpu_custom_call.1} parent=11 // pred_fallthru
        _
    $region12: #{tpu_custom_call.1} parent=5 // pred_fallthru
      _
    %p315 = scmp.lt.s32.totalorder %s15, 2
    // Predicated region
    $region29: #{tpu_custom_call.1} parent=5 // pred_check
      %p316 = pneg %p315
    $region30: #{tpu_custom_call.1} parent=5 // pred_check_branch
      %318 = sbr.rel (%p316) target = $region32
    $region31: #{tpu_custom_call.1} parent=5 // pred_region
      // Predicated region
      $region33: #{tpu_custom_call.1} parent=31 // pred_check
        %p319 = pneg %p58
      $region34: #{tpu_custom_call.1} parent=31 // pred_check_branch
        %321 = sbr.rel (%p319) target = $region36
      $region35: #{tpu_custom_call.1} parent=31 // pred_region
        %s322 = smul.u32 2, %s24
        %p323 = scmp.lt.s32.totalorder %s23, 1
        %s324 = scalar_select %p323, %s23, 1
        %p325 = scmp.lt.s32.totalorder %s22, 0
        %s326 = scalar_select %p325, %s22, 0
        %p327 = scmp.lt.s32.totalorder %s322, 1
        %s328 = scalar_select %p327, %s322, 1
        %s329 = smul.addr %s326, 2
        %s330 = sadd.s32 %s328, %s329
        %s331 = smul.addr %s324, 2
        %s332 = sadd.s32 %s330, %s331
        %s333 = smul.addr %s332, 4
        %s334 = scalar_lea.vmem %s0, %s333
        %s335 = smul.u32 2, %s24
      $region36: #{tpu_custom_call.1} parent=31 // pred_fallthru
        _
    $region32: #{tpu_custom_call.1} parent=5 // pred_fallthru
      _
    %p336 = scmp.le.s32.totalorder 1, %s15
    %p337 = scmp.lt.s32.totalorder %s15, 3
    %p338 = pnand %p336, %p337
    %p339 = pneg %p338
    // Predicated region
    $region37: #{tpu_custom_call.1} parent=5 // pred_check
      _
    $region38: #{tpu_custom_call.1} parent=5 // pred_check_branch
      %341 = sbr.rel (%p338) target = $region40
    $region39: #{tpu_custom_call.1} parent=5 // pred_region
      %s342 = ssub.s32 %s15, 1
      %s343 = smul.u32 2, %s27
      %p344 = scmp.lt.s32.totalorder %s26, 1
      %s345 = scalar_select %p344, %s26, 1
      %p346 = scmp.lt.s32.totalorder %s25, 0
      %s347 = scalar_select %p346, %s25, 0
      %p348 = scmp.lt.s32.totalorder %s343, 1
      %s349 = scalar_select %p348, %s343, 1
      %s350 = smul.addr %s347, 2
      %s351 = sadd.s32 %s349, %s350
      %s352 = smul.addr %s345, 2
      %s353 = sadd.s32 %s351, %s352
      %s354 = smul.addr %s353, 4
      %s355 = scalar_lea.vmem %s0, %s354
      %p356 = pneg %p64
      %p357 = pneg %p61
      %p358 = scmp.lt.s32.totalorder %s25, 0
      %s359 = scalar_select %p358, %s25, 0
      %s360 = smul.addr %s359, 4
      %s361 = scalar_lea.vmem %s1, %s360
      %p362 = pneg %p90
      %p363 = pneg %p87
      %p364 = scmp.lt.s32.totalorder %s25, 0
      %s365 = scalar_select %p364, %s25, 0
      %s366 = smul.addr %s365, 4
      %s367 = scalar_lea.vmem %s2, %s366
      %p368 = pneg %p116
      %p369 = pneg %p113
      %p370 = scmp.lt.s32.totalorder %s25, 0
      %s371 = scalar_select %p370, %s25, 0
      %s372 = smul.addr %s371, 4
      %s373 = scalar_lea.vmem %s3, %s372
      %p374 = pneg %p142
      %p375 = pneg %p139
      %p376 = scmp.lt.s32.totalorder %s25, 0
      %s377 = scalar_select %p376, %s25, 0
      %s378 = smul.addr %s377, 4
      %s379 = scalar_lea.vmem %s4, %s378
      %p380 = pneg %p168
      %p381 = pneg %p165
      %p382 = pneg %p194
      %p383 = pneg %p191
      %p384 = scmp.lt.s32.totalorder %s25, 0
      %s385 = scalar_select %p384, %s25, 0
      %s386 = smul.addr %s385, 4
      %s387 = scalar_lea.vmem %s5, %s386
      %p388 = pneg %p220
      %p389 = pneg %p217
      %p390 = scmp.lt.s32.totalorder %s25, 0
      %s391 = scalar_select %p390, %s25, 0
      %s392 = smul.addr %s391, 4
      %s393 = scalar_lea.vmem %s6, %s392
      %p394 = pneg %p246
      %p395 = pneg %p243
      %p396 = scmp.lt.s32.totalorder %s25, 0
      %s397 = scalar_select %p396, %s25, 0
      %s398 = smul.addr %s397, 4
      %s399 = scalar_lea.vmem %s7, %s398
      %p400 = pneg %p272
      %p401 = pneg %p269
      %p402 = scmp.lt.s32.totalorder %s25, 0
      %s403 = scalar_select %p402, %s25, 0
      %s404 = smul.addr %s403, 4
      %s405 = scalar_lea.vmem %s8, %s404
      %s406 = smul.u32 2, %s27
      %p407 = scmp.lt.s32.totalorder %s26, 1
      %s408 = scalar_select %p407, %s26, 1
      %p409 = scmp.lt.s32.totalorder %s25, 0
      %s410 = scalar_select %p409, %s25, 0
      %p411 = scmp.lt.s32.totalorder %s406, 1
      %s412 = scalar_select %p411, %s406, 1
      %s413 = smul.addr %s410, 2
      %s414 = sadd.s32 %s412, %s413
      %s415 = smul.addr %s408, 2
      %s416 = sadd.s32 %s414, %s415
      %s417 = smul.addr %s416, 4
      %s418 = scalar_lea.vmem %s0, %s417
      %s419 = smul.u32 2, %s27
      %p420 = scmp.lt.s32.totalorder %s25, 0
      %s421 = scalar_select %p420, %s25, 0
      %s422 = smul.addr %s421, 4
      %s423 = scalar_lea.vmem %s1, %s422
      %p424 = scmp.lt.s32.totalorder %s25, 0
      %s425 = scalar_select %p424, %s25, 0
      %s426 = smul.addr %s425, 4
      %s427 = scalar_lea.vmem %s2, %s426
      %p428 = scmp.lt.s32.totalorder %s25, 0
      %s429 = scalar_select %p428, %s25, 0
      %s430 = smul.addr %s429, 4
      %s431 = scalar_lea.vmem %s3, %s430
      %p432 = scmp.lt.s32.totalorder %s25, 0
      %s433 = scalar_select %p432, %s25, 0
      %s434 = smul.addr %s433, 4
      %s435 = scalar_lea.vmem %s4, %s434
      %p436 = scmp.lt.s32.totalorder %s25, 0
      %s437 = scalar_select %p436, %s25, 0
      %s438 = smul.addr %s437, 4
      %s439 = scalar_lea.vmem %s5, %s438
      %p440 = scmp.lt.s32.totalorder %s25, 0
      %s441 = scalar_select %p440, %s25, 0
      %s442 = smul.addr %s441, 4
      %s443 = scalar_lea.vmem %s6, %s442
      %p444 = scmp.lt.s32.totalorder %s25, 0
      %s445 = scalar_select %p444, %s25, 0
      %s446 = smul.addr %s445, 4
      %s447 = scalar_lea.vmem %s7, %s446
      %p448 = scmp.lt.s32.totalorder %s25, 0
      %s449 = scalar_select %p448, %s25, 0
      %s450 = smul.addr %s449, 4
      %s451 = scalar_lea.vmem %s8, %s450
      %p452 = scmp.eq.s32.totalorder %s26, 0
      %p453 = scmp.eq.s32.totalorder %s27, 0
      %p454 = pnand %p452, %p453
      %p455 = pneg %p454
      // Predicated region
      $region41: #{tpu_custom_call.1} parent=39 // pred_check
        _
      $region42: #{tpu_custom_call.1} parent=39 // pred_check_branch
        %457 = sbr.rel (%p454) target = $region44
      $region43: #{tpu_custom_call.1} parent=39 // pred_region
        %vm458 = vcmask 3072
        %459 = vst.msk [vmem:[#allocation2] sm:$0xf] %vm458, 0.0
        %460 = vst.msk [vmem:[#allocation3] sm:$0xf] %vm458, 0.0
      $region44: #{tpu_custom_call.1} parent=39 // pred_fallthru
        _
      %v461 = vld [vmem:[%s418] sm:$0xff]
      %v462 = vld [vmem:[#allocation2] sm:$0xf]
      %v464 = vcombine.high %v461, %v461
      %vm466 = vcmask 1043456
      %v467 = vsel %vm466, %v461, 0.0
      %v468 = vsel %vm466, %v464, 0.0
      %v469 = vadd.f32 %v467, %v468
      %470 = vadd.xlane.f32.xlu0 %v469
      %v471 = vpop.xlane.xlu0 %470
      %v472 = vadd.f32 %v462, %v471
      %vm473 = vcmask 3072
      %474 = vst.msk [vmem:[#allocation2] sm:$0xf] %vm473, %v472
      %v475 = vld [vmem:[#allocation3] sm:$0xf]
      %v476 = vmul.f32 %v461, %v461
      %v478 = vcombine.high %v476, %v476
      %v480 = vsel %vm466, %v476, 0.0
      %v481 = vsel %vm466, %v478, 0.0
      %v482 = vadd.f32 %v480, %v481
      %483 = vadd.xlane.f32.xlu0 %v482
      %v484 = vpop.xlane.xlu0 %483
      %v485 = vadd.f32 %v475, %v484
      %486 = vst.msk [vmem:[#allocation3] sm:$0xf] %vm473, %v485
      %p487 = scmp.eq.s32.totalorder %s26, 1
      %p488 = pnand %p487, %p453
      %p489 = pneg %p488
      // Predicated region
      $region45: #{tpu_custom_call.1} parent=39 // pred_check
        _
      $region46: #{tpu_custom_call.1} parent=39 // pred_check_branch
        %491 = sbr.rel (%p488) target = $region48
      $region47: #{tpu_custom_call.1} parent=39 // pred_region
        %v492 = vld [vmem:[#allocation2] sm:$0xf]
        %v493 = vmul.f32 %v492, 0.001953125
        %v494 = vld [vmem:[#allocation3] sm:$0xf]
        %v495 = vmul.f32 %v494, 0.001953125
        %v496 = vmul.f32 %v493, %v493
        %v497 = vsub.f32 %v495, %v496
        %v498 = vld [vmem:[%s423] sm:$0xf]
        %v499 = vmul.f32 %v498, 0.9
        %v500 = vmul.f32 %v493, 0.1
        %v501 = vadd.f32 %v499, %v500
        %v502 = vld [vmem:[%s427] sm:$0xf]
        %v503 = vmul.f32 %v502, 0.9
        %v504 = vmul.f32 %v497, 0.1
        %v505 = vadd.f32 %v503, %v504
        %506 = vst.msk [vmem:[%s439] sm:$0xf] %vm473, %v501
        %507 = vst.msk [vmem:[%s443] sm:$0xf] %vm473, %v505
        %v508 = vld [vmem:[%s431] sm:$0xf]
        %v509 = vadd.f32 %v505, 1e-05
        %v510 = vrsqrt.pop %v509
        %v511 = vmul.f32 %v508, %v510
        %512 = vst.msk [vmem:[%s447] sm:$0xf] %vm473, %v511
        %v513 = vld [vmem:[%s435] sm:$0xf]
        %v514 = vmul.f32 %v501, %v511
        %v515 = vsub.f32 %v513, %v514
        %516 = vst.msk [vmem:[%s451] sm:$0xf] %vm473, %v515
      $region48: #{tpu_custom_call.1} parent=39 // pred_fallthru
        _
      %p517 = scmp.lt.s32.totalorder %s25, 0
      %s518 = scalar_select %p517, %s25, 0
      %s519 = smul.addr %s518, 4
      %s520 = scalar_lea.vmem %s5, %s519
      %p521 = scmp.lt.s32.totalorder %s25, 0
      %s522 = scalar_select %p521, %s25, 0
      %s523 = smul.addr %s522, 4
      %s524 = scalar_lea.vmem %s6, %s523
      %p525 = scmp.lt.s32.totalorder %s25, 0
      %s526 = scalar_select %p525, %s25, 0
      %s527 = smul.addr %s526, 4
      %s528 = scalar_lea.vmem %s7, %s527
      %p529 = scmp.lt.s32.totalorder %s25, 0
      %s530 = scalar_select %p529, %s25, 0
      %s531 = smul.addr %s530, 4
      %s532 = scalar_lea.vmem %s8, %s531
      // Predicated region
      $region49: #{tpu_custom_call.1} parent=39 // pred_check
        %p533 = pneg %p191
      $region50: #{tpu_custom_call.1} parent=39 // pred_check_branch
        %535 = sbr.rel (%p533) target = $region52
      $region51: #{tpu_custom_call.1} parent=39 // pred_region
        _
      $region52: #{tpu_custom_call.1} parent=39 // pred_fallthru
        _
      // Predicated region
      $region53: #{tpu_custom_call.1} parent=39 // pred_check
        %p536 = pneg %p217
      $region54: #{tpu_custom_call.1} parent=39 // pred_check_branch
        %538 = sbr.rel (%p536) target = $region56
      $region55: #{tpu_custom_call.1} parent=39 // pred_region
        _
      $region56: #{tpu_custom_call.1} parent=39 // pred_fallthru
        _
      // Predicated region
      $region57: #{tpu_custom_call.1} parent=39 // pred_check
        %p539 = pneg %p243
      $region58: #{tpu_custom_call.1} parent=39 // pred_check_branch
        %541 = sbr.rel (%p539) target = $region60
      $region59: #{tpu_custom_call.1} parent=39 // pred_region
        _
      $region60: #{tpu_custom_call.1} parent=39 // pred_fallthru
        _
      // Predicated region
      $region61: #{tpu_custom_call.1} parent=39 // pred_check
        %p542 = pneg %p269
      $region62: #{tpu_custom_call.1} parent=39 // pred_check_branch
        %544 = sbr.rel (%p542) target = $region64
      $region63: #{tpu_custom_call.1} parent=39 // pred_region
        _
      $region64: #{tpu_custom_call.1} parent=39 // pred_fallthru
        _
      // Predicated region
      $region65: #{tpu_custom_call.1} parent=39 // pred_check
        %p545 = pneg %p191
      $region66: #{tpu_custom_call.1} parent=39 // pred_check_branch
        %547 = sbr.rel (%p545) target = $region68
      $region67: #{tpu_custom_call.1} parent=39 // pred_region
        %p548 = scmp.lt.s32.totalorder %s25, 0
        %s549 = scalar_select %p548, %s25, 0
        %s550 = smul.addr %s549, 4
        %s551 = scalar_lea.vmem %s5, %s550
      $region68: #{tpu_custom_call.1} parent=39 // pred_fallthru
        _
      // Predicated region
      $region69: #{tpu_custom_call.1} parent=39 // pred_check
        %p552 = pneg %p217
      $region70: #{tpu_custom_call.1} parent=39 // pred_check_branch
        %554 = sbr.rel (%p552) target = $region72
      $region71: #{tpu_custom_call.1} parent=39 // pred_region
        %p555 = scmp.lt.s32.totalorder %s25, 0
        %s556 = scalar_select %p555, %s25, 0
        %s557 = smul.addr %s556, 4
        %s558 = scalar_lea.vmem %s6, %s557
      $region72: #{tpu_custom_call.1} parent=39 // pred_fallthru
        _
      // Predicated region
      $region73: #{tpu_custom_call.1} parent=39 // pred_check
        %p559 = pneg %p243
      $region74: #{tpu_custom_call.1} parent=39 // pred_check_branch
        %561 = sbr.rel (%p559) target = $region76
      $region75: #{tpu_custom_call.1} parent=39 // pred_region
        %p562 = scmp.lt.s32.totalorder %s25, 0
        %s563 = scalar_select %p562, %s25, 0
        %s564 = smul.addr %s563, 4
        %s565 = scalar_lea.vmem %s7, %s564
      $region76: #{tpu_custom_call.1} parent=39 // pred_fallthru
        _
      // Predicated region
      $region77: #{tpu_custom_call.1} parent=39 // pred_check
        %p566 = pneg %p269
      $region78: #{tpu_custom_call.1} parent=39 // pred_check_branch
        %568 = sbr.rel (%p566) target = $region80
      $region79: #{tpu_custom_call.1} parent=39 // pred_region
        %p569 = scmp.lt.s32.totalorder %s25, 0
        %s570 = scalar_select %p569, %s25, 0
        %s571 = smul.addr %s570, 4
        %s572 = scalar_lea.vmem %s8, %s571
      $region80: #{tpu_custom_call.1} parent=39 // pred_fallthru
        _
    $region40: #{tpu_custom_call.1} parent=5 // pred_fallthru
      _
    %p573 = scmp.le.s32.totalorder 2, %s15
    // Predicated region
    $region81: #{tpu_custom_call.1} parent=5 // pred_check
      %p574 = pneg %p573
    $region82: #{tpu_custom_call.1} parent=5 // pred_check_branch
      %576 = sbr.rel (%p574) target = $region84
    $region83: #{tpu_custom_call.1} parent=5 // pred_region
      %s577 = ssub.s32 %s15, 2
    $region84: #{tpu_custom_call.1} parent=5 // pred_fallthru
      _
  $region6: #{tpu_custom_call.1} parent=0 // loop_footer
    %s19 = sadd.s32 1, %s15
  $region7: #{tpu_custom_call.1} parent=0 // loop_footer_branch
    %14 = sbr.rel target = $region3
  $region8: #{tpu_custom_call.1} parent=0 // loop_exit
    _

</llo_original>
